<compile_context>
chip_gen: v6e
topology: v6e:2x2x1
jax: 0.10.0
libtpu: 0.0.40
codegen_flags: <defaults>
</compile_context>

<pallas_src>
import functools

import jax
import jax.numpy as jnp
from jax import lax
from jax.experimental import pallas as pl
from jax.experimental.pallas import tpu as pltpu

# ----- module "hyper-parameters" (RefineMultiBoxLoss.__init__ args) -----------
NUM_CLASSES = 8
OVERLAP_THRESH = 0.5
NEG_POS_RATIO = 3
VARIANCES = (0.1, 0.2)
BISECT_ITERS = 16          # per-row threshold-search passes for hard-neg mining


def _round_up(x, m):
    return ((x + m - 1) // m) * m


# ============================ Pallas kernel ==================================
def _refine_multibox_loss_kernel(loc_ref, conf_ref, loct_ref, conft_ref,
                                 ll_out, lc_out, np_out,
                                 mine_all, ll_acc, pce_acc, npos_acc, rmax_acc,
                                 *, num_priors, tile_p):
    pt = pl.program_id(1)
    npt = pl.num_programs(1)

    @pl.when(pt == 0)
    def _init():
        ll_acc[...] = jnp.zeros_like(ll_acc)
        pce_acc[...] = jnp.zeros_like(pce_acc)
        npos_acc[...] = jnp.zeros_like(npos_acc)
        rmax_acc[...] = jnp.zeros_like(rmax_acc)

    conf = conf_ref[...].astype(jnp.float32)          # (1, C, TP), priors on lanes
    conf_t = conft_ref[...][:, 0, :]                  # (1, TP) int32
    _, C, TP = conf.shape

    # mask priors that only exist because of lane padding
    lane = lax.broadcasted_iota(jnp.int32, (1, TP), 1)
    valid = (pt * tile_p + lane) < num_priors         # (1, TP) bool
    pos = (conf_t > 0) & valid
    posf = pos.astype(jnp.float32)

    # ---- localization loss: smooth L1 over positive priors, accumulated -----
    diff = loc_ref[...].astype(jnp.float32) - loct_ref[...].astype(jnp.float32)
    absd = jnp.abs(diff)
    sl1 = jnp.where(absd < 1.0, 0.5 * diff * diff, absd - 0.5)   # (1, 4, TP)
    ll_acc[...] += jnp.sum(sl1, axis=1) * posf                   # (1, TP)

    # ---- per-prior cross-entropy: fused log-sum-exp over the class sublanes -
    cmax = jnp.max(conf, axis=1, keepdims=True)                            # (1,1,TP)
    lse = jnp.log(jnp.sum(jnp.exp(conf - cmax), axis=1)) + cmax[:, 0, :]   # (1,TP)
    # target-logit gather via one minimal iota + a single compare
    cls_iota = lax.broadcasted_iota(jnp.int32, (1, C, 1), 1)
    onehot = (cls_iota == conf_t[:, None, :]).astype(jnp.float32)          # (1,C,TP)
    tgt = jnp.sum(conf * onehot, axis=1)                                   # (1,TP)
    ce = lse - tgt

    pce_acc[...] += ce * posf                          # CE of positives (streamed)
    npos_acc[...] += posf                              # positive count (streamed)

    # mining loss: positives and padded lanes zeroed (CE >= 0 for real negatives)
    mine = jnp.where(pos | jnp.logical_not(valid), 0.0, ce)
    mine_all[pt] = mine                                # park this row's tile
    rmax_acc[...] = jnp.maximum(rmax_acc[...], mine)   # streamed row max

    @pl.when(pt == npt - 1)
    def _finalize():
        npos = jnp.sum(npos_acc[...])                                  # scalar
        num_neg = jnp.minimum(jnp.float32(NEG_POS_RATIO) * npos,
                              jnp.float32(num_priors - 1))
        mall = mine_all[...]                                           # (NPT,1,TP)

        # per-row count-above-threshold bisection on [0, row_max]; lo0 = 0 keeps
        # positives / padded lanes (mine == 0) out even when num_neg saturates.
        hi0 = jnp.max(rmax_acc[...])
        lo0 = jnp.zeros_like(hi0)

        def bisect(_, carry):
            lo, hi = carry
            mid = 0.5 * (lo + hi)
            cnt = jnp.sum((mall > mid).astype(jnp.float32))
            ok = cnt <= num_neg
            return jnp.where(ok, lo, mid), jnp.where(ok, mid, hi)

        _, thr = lax.fori_loop(0, BISECT_ITERS, bisect, (lo0, hi0))
        # TODO(synk): torch.sort top-k tie order is unspecified; this threshold
        # selection only differs on exact ties / zero-CE negatives (which add 0).
        neg_ce = jnp.sum(jnp.where(mall > thr, mall, 0.0))

        lc = jnp.sum(pce_acc[...]) + neg_ce            # CE over pos | mined neg
        ll = jnp.sum(ll_acc[...])                      # smooth L1 over positives

        ones = jnp.ones(ll_out.shape, jnp.float32)     # lane-dense partial outputs
        ll_out[...] = ll * ones
        lc_out[...] = lc * ones
        np_out[...] = npos * ones


def refine_multibox_loss(loc_data, conf_data, loc_t, conf_t, tile_p=1024):
    """Returns (loss_l, loss_c) scalars; semantics of RefineMultiBoxLoss.forward
    with arm_data=None, only_loc=False (plus an N==0 guard; the reference NaNs)."""
    B, P, C = conf_data.shape

    TP = min(_round_up(P, 128), _round_up(tile_p, 128))
    P_pad = _round_up(P, TP)
    NPT = P_pad // TP

    # lane-dense layouts: priors on the last (lane) axis.
    # TODO(synk): if the ODM head can emit channel-major (B,C,P)/(B,4,P) (and/or
    # bf16) directly, drop these transposes -- pure HBM-bytes win.
    conf_cp = jnp.transpose(conf_data, (0, 2, 1))      # (B, C, P)
    loc_cp = jnp.transpose(loc_data, (0, 2, 1))        # (B, 4, P)
    loct_cp = jnp.transpose(loc_t, (0, 2, 1))          # (B, 4, P)
    conft_3d = conf_t.astype(jnp.int32)[:, None, :]    # (B, 1, P)

    pad = P_pad - P
    if pad:
        conf_cp = jnp.pad(conf_cp, ((0, 0), (0, 0), (0, pad)))
        loc_cp = jnp.pad(loc_cp, ((0, 0), (0, 0), (0, pad)))
        loct_cp = jnp.pad(loct_cp, ((0, 0), (0, 0), (0, pad)))
        conft_3d = jnp.pad(conft_3d, ((0, 0), (0, 0), (0, pad)))

    kern = functools.partial(_refine_multibox_loss_kernel,
                             num_priors=P, tile_p=TP)
    out_shape = (jax.ShapeDtypeStruct((B, 1, 128), jnp.float32),) * 3
    out_spec = pl.BlockSpec((1, 1, 128), lambda b, pt: (b, 0, 0))

    ll_p, lc_p, np_p = pl.pallas_call(
        kern,
        out_shape=out_shape,
        grid_spec=pltpu.PrefetchScalarGridSpec(
            num_scalar_prefetch=0,
            grid=(B, NPT),                                   # batch, prior tiles
            in_specs=[
                pl.BlockSpec((1, 4, TP), lambda b, pt: (b, 0, pt)),   # loc_data
                pl.BlockSpec((1, C, TP), lambda b, pt: (b, 0, pt)),   # conf_data
                pl.BlockSpec((1, 4, TP), lambda b, pt: (b, 0, pt)),   # loc_t
                pl.BlockSpec((1, 1, TP), lambda b, pt: (b, 0, pt)),   # conf_t
            ],
            out_specs=(out_spec, out_spec, out_spec),
            scratch_shapes=[
                pltpu.VMEM((NPT, 1, TP), jnp.float32),   # parked mining CE (one row)
                pltpu.VMEM((1, TP), jnp.float32),        # loc-loss accumulator
                pltpu.VMEM((1, TP), jnp.float32),        # positive-CE accumulator
                pltpu.VMEM((1, TP), jnp.float32),        # num-pos accumulator
                pltpu.VMEM((1, TP), jnp.float32),        # running max of mining CE
            ]),
        compiler_params=pltpu.CompilerParams(
            # batch rows are independent (v7x megacore); prior-tile axis carries
            # the per-row scratch so it must stay a sequential reduction.
            dimension_semantics=("parallel", "arbitrary"),
            vmem_limit_bytes=32 * 1024 * 1024),
    )(loc_cp, conf_cp, loct_cp, conft_3d)

    ll = jnp.sum(ll_p[:, 0, 0])
    lc = jnp.sum(lc_p[:, 0, 0])
    n_total = jnp.maximum(jnp.sum(np_p[:, 0, 0]), 1.0)   # N==0 guard (ref -> NaN)
    return ll / n_total, lc / n_total


# ===================== matching glue (plain JAX, from box_utils) =============
def point_form(priors):
    return jnp.concatenate([priors[:, :2] - priors[:, 2:] / 2,
                            priors[:, :2] + priors[:, 2:] / 2], axis=1)


def jaccard(box_a, box_b):
    max_xy = jnp.minimum(box_a[:, None, 2:], box_b[None, :, 2:])
    min_xy = jnp.maximum(box_a[:, None, :2], box_b[None, :, :2])
    inter = jnp.clip(max_xy - min_xy, 0.0, None)
    inter = inter[..., 0] * inter[..., 1]
    area_a = ((box_a[:, 2] - box_a[:, 0]) * (box_a[:, 3] - box_a[:, 1]))[:, None]
    area_b = ((box_b[:, 2] - box_b[:, 0]) * (box_b[:, 3] - box_b[:, 1]))[None, :]
    return inter / (area_a + area_b - inter)


def encode(matched, priors, variances):
    g_cxcy = (matched[:, :2] + matched[:, 2:]) / 2 - priors[:, :2]
    g_cxcy = g_cxcy / (variances[0] * priors[:, 2:])
    g_wh = (matched[:, 2:] - matched[:, :2]) / priors[:, 2:]
    g_wh = jnp.log(g_wh) / variances[1]
    return jnp.concatenate([g_cxcy, g_wh], axis=1)


def match_one(threshold, truths, priors, variances, labels):
    overlaps = jaccard(truths, point_form(priors))            # (K, P)
    best_prior_idx = jnp.argmax(overlaps, axis=1)             # (K,)
    best_truth_overlap = jnp.max(overlaps, axis=0)            # (P,)
    best_truth_idx = jnp.argmax(overlaps, axis=0)             # (P,)
    best_truth_overlap = best_truth_overlap.at[best_prior_idx].set(2.0)
    best_truth_idx = best_truth_idx.at[best_prior_idx].set(
        jnp.arange(truths.shape[0]))
    matches = truths[best_truth_idx]                          # (P, 4)
    conf = labels[best_truth_idx].astype(jnp.int32) + 1       # (P,)
    conf = jnp.where(best_truth_overlap < threshold, 0, conf)
    loc = encode(matches, priors, variances)
    return loc, conf


# ================================ demo =======================================
if __name__ == "__main__":
    key = jax.random.PRNGKey(0)
    B, C, K = 2, NUM_CLASSES, 3
    gx, gy = 25, 24
    P = gx * gy                       # 600 priors: not a multiple of 128 -> pads
    k1, k2, k3, k4, k5 = jax.random.split(key, 5)

    # priors: gx x gy grid of centers, fixed 0.2 size, (cx, cy, w, h) in [0, 1]
    cx = (jnp.arange(gx, dtype=jnp.float32) + 0.5) / gx
    cy = (jnp.arange(gy, dtype=jnp.float32) + 0.5) / gy
    cxg, cyg = jnp.meshgrid(cx, cy)
    priors = jnp.stack([cxg.reshape(-1), cyg.reshape(-1),
                        jnp.full((P,), 0.2, jnp.float32),
                        jnp.full((P,), 0.2, jnp.float32)], axis=1)   # (P, 4)

    # synthetic ground truth: targets[b] = [xmin, ymin, xmax, ymax, label]
    centers = jax.random.uniform(k1, (B, K, 2), minval=0.2, maxval=0.8)
    sizes = jax.random.uniform(k2, (B, K, 2), minval=0.1, maxval=0.3)
    labels = jax.random.randint(k3, (B, K), 0, C - 1).astype(jnp.float32)
    targets = jnp.concatenate(
        [centers - sizes / 2, centers + sizes / 2, labels[..., None]], axis=2)

    # odm head outputs (loc_data, conf_data)
    loc_data = jax.random.normal(k4, (B, P, 4), dtype=jnp.float32) * 0.1
    conf_data = jax.random.normal(k5, (B, P, C), dtype=jnp.float32)

    # matching step (no-grad data prep, mirrors box_utils.match), vmapped
    loc_t, conf_t = jax.vmap(
        lambda t: match_one(OVERLAP_THRESH, t[:, :4], priors, VARIANCES, t[:, 4])
    )(targets)

    # small tile in the demo so the padded multi-tile grid path is exercised
    loss_l, loss_c = refine_multibox_loss(loc_data, conf_data,
                                          loc_t, conf_t.astype(jnp.int32),
                                          tile_p=256)
    jax.block_until_ready((loss_l, loss_c))
    assert bool(jnp.isfinite(loss_l)) and bool(jnp.isfinite(loss_c))
    print("KERNEL_OK")
</pallas_src>

<mosaic_0001>
module attributes {stable_mosaic.version = 11 : i64} {
  func.func @_refine_multibox_loss_kernel(%arg0: i32, %arg1: i32, %arg2: memref<1x4x256xf32, #tpu.memory_space<vmem>>, %arg3: memref<1x8x256xf32, #tpu.memory_space<vmem>>, %arg4: memref<1x4x256xf32, #tpu.memory_space<vmem>>, %arg5: memref<1x1x256xi32, #tpu.memory_space<vmem>>, %arg6: memref<1x1x128xf32, #tpu.memory_space<vmem>>, %arg7: memref<1x1x128xf32, #tpu.memory_space<vmem>>, %arg8: memref<1x1x128xf32, #tpu.memory_space<vmem>>, %arg9: memref<3x1x256xf32, #tpu.memory_space<vmem>>, %arg10: memref<1x256xf32, #tpu.memory_space<vmem>>, %arg11: memref<1x256xf32, #tpu.memory_space<vmem>>, %arg12: memref<1x256xf32, #tpu.memory_space<vmem>>, %arg13: memref<1x256xf32, #tpu.memory_space<vmem>>) attributes {dimension_semantics = [#tpu.dimension_semantics<parallel>, #tpu.dimension_semantics<arbitrary>], iteration_bounds = array<i64: 2, 3>, scalar_prefetch = 0 : i64, scratch_operands = 5 : i64, tpu.core_type = #tpu.core_type<tc>, window_params = [{transform_indices = @transform_0, window_bounds = array<i64: 1, 4, 256>}, {transform_indices = @transform_1, window_bounds = array<i64: 1, 8, 256>}, {transform_indices = @transform_2, window_bounds = array<i64: 1, 4, 256>}, {transform_indices = @transform_3, window_bounds = array<i64: 1, 1, 256>}, {transform_indices = @transform_4, window_bounds = array<i64: 1, 1, 128>}, {transform_indices = @transform_5, window_bounds = array<i64: 1, 1, 128>}, {transform_indices = @transform_6, window_bounds = array<i64: 1, 1, 128>}]} {
    %c0_i32 = arith.constant 0 : i32
    %0 = arith.cmpi eq, %arg1, %c0_i32 : i32
    %1 = arith.extui %0 : i1 to i32
    %c0_i32_0 = arith.constant 0 : i32
    %2 = arith.cmpi ne, %1, %c0_i32_0 : i32
    scf.if %2 {
      %cst_40 = arith.constant 0.000000e+00 : f32
      %74 = vector.broadcast %cst_40 : f32 to vector<1x256xf32>
      %c0_41 = arith.constant 0 : index
      %c0_42 = arith.constant 0 : index
      %75 = vector.load %arg10[%c0_41, %c0_42] : memref<1x256xf32, #tpu.memory_space<vmem>>, vector<1x256xf32>
      tpu.vector_store %arg10[%c0_41, %c0_42], %74 {strides = array<i32>} : memref<1x256xf32, #tpu.memory_space<vmem>>, vector<1x256xf32>,
      %cst_43 = arith.constant 0.000000e+00 : f32
      %76 = vector.broadcast %cst_43 : f32 to vector<1x256xf32>
      %c0_44 = arith.constant 0 : index
      %c0_45 = arith.constant 0 : index
      %77 = vector.load %arg11[%c0_44, %c0_45] : memref<1x256xf32, #tpu.memory_space<vmem>>, vector<1x256xf32>
      tpu.vector_store %arg11[%c0_44, %c0_45], %76 {strides = array<i32>} : memref<1x256xf32, #tpu.memory_space<vmem>>, vector<1x256xf32>,
      %cst_46 = arith.constant 0.000000e+00 : f32
      %78 = vector.broadcast %cst_46 : f32 to vector<1x256xf32>
      %c0_47 = arith.constant 0 : index
      %c0_48 = arith.constant 0 : index
      %79 = vector.load %arg12[%c0_47, %c0_48] : memref<1x256xf32, #tpu.memory_space<vmem>>, vector<1x256xf32>
      tpu.vector_store %arg12[%c0_47, %c0_48], %78 {strides = array<i32>} : memref<1x256xf32, #tpu.memory_space<vmem>>, vector<1x256xf32>,
      %cst_49 = arith.constant 0.000000e+00 : f32
      %80 = vector.broadcast %cst_49 : f32 to vector<1x256xf32>
      %c0_50 = arith.constant 0 : index
      %c0_51 = arith.constant 0 : index
      %81 = vector.load %arg13[%c0_50, %c0_51] : memref<1x256xf32, #tpu.memory_space<vmem>>, vector<1x256xf32>
      tpu.vector_store %arg13[%c0_50, %c0_51], %80 {strides = array<i32>} : memref<1x256xf32, #tpu.memory_space<vmem>>, vector<1x256xf32>,
    } else {
    }
    %c0 = arith.constant 0 : index
    %c0_1 = arith.constant 0 : index
    %c0_2 = arith.constant 0 : index
    %3 = vector.load %arg3[%c0, %c0_1, %c0_2] : memref<1x8x256xf32, #tpu.memory_space<vmem>>, vector<1x8x256xf32>
    %c0_3 = arith.constant 0 : index
    %c0_4 = arith.constant 0 : index
    %c0_5 = arith.constant 0 : index
    %4 = vector.load %arg5[%c0_3, %c0_4, %c0_5] : memref<1x1x256xi32, #tpu.memory_space<vmem>>, vector<1x1x256xi32>
    %5 = vector.shape_cast %4 : vector<1x1x256xi32> to vector<1x256xi32>
    %6 = tpu.iota {dimensions = array<i32: 1>} : vector<1x256xi32>
    %c256_i32 = arith.constant 256 : i32
    %7 = arith.muli %arg1, %c256_i32 : i32
    %8 = vector.broadcast %7 : i32 to vector<1x256xi32>
    %9 = arith.addi %8, %6 : vector<1x256xi32>
    %c600_i32 = arith.constant 600 : i32
    %10 = vector.broadcast %c600_i32 : i32 to vector<1x256xi32>
    %11 = arith.cmpi slt, %9, %10 : vector<1x256xi32>
    %c0_i32_6 = arith.constant 0 : i32
    %12 = vector.broadcast %c0_i32_6 : i32 to vector<1x256xi32>
    %13 = arith.cmpi sgt, %5, %12 : vector<1x256xi32>
    %14 = arith.andi %13, %11 : vector<1x256xi1>
    %15 = arith.extui %14 : vector<1x256xi1> to vector<1x256xi32>
    %16 = arith.sitofp %15 : vector<1x256xi32> to vector<1x256xf32>
    %c0_7 = arith.constant 0 : index
    %c0_8 = arith.constant 0 : index
    %c0_9 = arith.constant 0 : index
    %17 = vector.load %arg2[%c0_7, %c0_8, %c0_9] : memref<1x4x256xf32, #tpu.memory_space<vmem>>, vector<1x4x256xf32>
    %c0_10 = arith.constant 0 : index
    %c0_11 = arith.constant 0 : index
    %c0_12 = arith.constant 0 : index
    %18 = vector.load %arg4[%c0_10, %c0_11, %c0_12] : memref<1x4x256xf32, #tpu.memory_space<vmem>>, vector<1x4x256xf32>
    %19 = arith.subf %17, %18 : vector<1x4x256xf32>
    %20 = math.absf %19 : vector<1x4x256xf32>
    %cst = arith.constant 1.000000e+00 : f32
    %21 = vector.broadcast %cst : f32 to vector<1x4x256xf32>
    %22 = arith.cmpf olt, %20, %21 : vector<1x4x256xf32>
    %cst_13 = arith.constant 5.000000e-01 : f32
    %23 = vector.broadcast %cst_13 : f32 to vector<1x4x256xf32>
    %24 = arith.mulf %23, %19 : vector<1x4x256xf32>
    %25 = arith.mulf %24, %19 : vector<1x4x256xf32>
    %cst_14 = arith.constant 5.000000e-01 : f32
    %26 = vector.broadcast %cst_14 : f32 to vector<1x4x256xf32>
    %27 = arith.subf %20, %26 : vector<1x4x256xf32>
    %28 = arith.select %22, %25, %27 : vector<1x4x256xi1>, vector<1x4x256xf32>
    %c0_15 = arith.constant 0 : index
    %c0_16 = arith.constant 0 : index
    %29 = vector.load %arg10[%c0_15, %c0_16] : memref<1x256xf32, #tpu.memory_space<vmem>>, vector<1x256xf32>
    %cst_17 = arith.constant dense<0.000000e+00> : vector<1x256xf32>
    %30 = vector.multi_reduction <add>, %28, %cst_17 [1] : vector<1x4x256xf32> to vector<1x256xf32>
    %31 = arith.mulf %30, %16 : vector<1x256xf32>
    %32 = arith.addf %29, %31 : vector<1x256xf32>
    %c0_18 = arith.constant 0 : index
    %c0_19 = arith.constant 0 : index
    %33 = vector.load %arg10[%c0_18, %c0_19] : memref<1x256xf32, #tpu.memory_space<vmem>>, vector<1x256xf32>
    tpu.vector_store %arg10[%c0_18, %c0_19], %32 {strides = array<i32>} : memref<1x256xf32, #tpu.memory_space<vmem>>, vector<1x256xf32>,
    %cst_20 = arith.constant dense<0xFF800000> : vector<1x256xf32>
    %34 = vector.multi_reduction <maximumf>, %3, %cst_20 [1] : vector<1x8x256xf32> to vector<1x256xf32>
    %35 = vector.shape_cast %34 : vector<1x256xf32> to vector<1x1x256xf32>
    %36 = vector.broadcast %35 : vector<1x1x256xf32> to vector<1x8x256xf32>
    %37 = arith.subf %3, %36 : vector<1x8x256xf32>
    %38 = math.exp %37 : vector<1x8x256xf32>
    %cst_21 = arith.constant dense<0.000000e+00> : vector<1x256xf32>
    %39 = vector.multi_reduction <add>, %38, %cst_21 [1] : vector<1x8x256xf32> to vector<1x256xf32>
    %40 = math.log %39 : vector<1x256xf32>
    %41 = vector.shape_cast %35 : vector<1x1x256xf32> to vector<1x256xf32>
    %42 = arith.addf %40, %41 : vector<1x256xf32>
    %43 = tpu.iota {dimensions = array<i32: 1>} : vector<1x8x1xi32>
    %44 = vector.shape_cast %5 : vector<1x256xi32> to vector<1x1x256xi32>
    %45 = vector.broadcast %43 : vector<1x8x1xi32> to vector<1x8x256xi32>
    %46 = vector.broadcast %44 : vector<1x1x256xi32> to vector<1x8x256xi32>
    %47 = arith.cmpi eq, %45, %46 : vector<1x8x256xi32>
    %48 = arith.extui %47 : vector<1x8x256xi1> to vector<1x8x256xi32>
    %49 = arith.sitofp %48 : vector<1x8x256xi32> to vector<1x8x256xf32>
    %50 = arith.mulf %3, %49 : vector<1x8x256xf32>
    %cst_22 = arith.constant dense<0.000000e+00> : vector<1x256xf32>
    %51 = vector.multi_reduction <add>, %50, %cst_22 [1] : vector<1x8x256xf32> to vector<1x256xf32>
    %52 = arith.subf %42, %51 : vector<1x256xf32>
    %c0_23 = arith.constant 0 : index
    %c0_24 = arith.constant 0 : index
    %53 = vector.load %arg11[%c0_23, %c0_24] : memref<1x256xf32, #tpu.memory_space<vmem>>, vector<1x256xf32>
    %54 = arith.mulf %52, %16 : vector<1x256xf32>
    %55 = arith.addf %53, %54 : vector<1x256xf32>
    %c0_25 = arith.constant 0 : index
    %c0_26 = arith.constant 0 : index
    %56 = vector.load %arg11[%c0_25, %c0_26] : memref<1x256xf32, #tpu.memory_space<vmem>>, vector<1x256xf32>
    tpu.vector_store %arg11[%c0_25, %c0_26], %55 {strides = array<i32>} : memref<1x256xf32, #tpu.memory_space<vmem>>, vector<1x256xf32>,
    %c0_27 = arith.constant 0 : index
    %c0_28 = arith.constant 0 : index
    %57 = vector.load %arg12[%c0_27, %c0_28] : memref<1x256xf32, #tpu.memory_space<vmem>>, vector<1x256xf32>
    %58 = arith.addf %57, %16 : vector<1x256xf32>
    %c0_29 = arith.constant 0 : index
    %c0_30 = arith.constant 0 : index
    %59 = vector.load %arg12[%c0_29, %c0_30] : memref<1x256xf32, #tpu.memory_space<vmem>>, vector<1x256xf32>
    tpu.vector_store %arg12[%c0_29, %c0_30], %58 {strides = array<i32>} : memref<1x256xf32, #tpu.memory_space<vmem>>, vector<1x256xf32>,
    %cst_31 = arith.constant dense<true> : vector<1x256xi1>
    %60 = arith.xori %11, %cst_31 : vector<1x256xi1>
    %61 = arith.ori %14, %60 : vector<1x256xi1>
    %cst_32 = arith.constant 0.000000e+00 : f32
    %62 = vector.broadcast %cst_32 : f32 to vector<1x256xf32>
    %63 = arith.select %61, %62, %52 : vector<1x256xi1>, vector<1x256xf32>
    %64 = arith.index_cast %arg1 : i32 to index
    %c0_33 = arith.constant 0 : index
    %c0_34 = arith.constant 0 : index
    %65 = vector.load %arg9[%64, %c0_33, %c0_34] : memref<3x1x256xf32, #tpu.memory_space<vmem>>, vector<1x1x256xf32>
    %66 = vector.shape_cast %65 : vector<1x1x256xf32> to vector<1x256xf32>
    %67 = vector.shape_cast %63 : vector<1x256xf32> to vector<1x1x256xf32>
    tpu.vector_store %arg9[%64, %c0_33, %c0_34], %67 {strides = array<i32>} : memref<3x1x256xf32, #tpu.memory_space<vmem>>, vector<1x1x256xf32>,
    %c0_35 = arith.constant 0 : index
    %c0_36 = arith.constant 0 : index
    %68 = vector.load %arg13[%c0_35, %c0_36] : memref<1x256xf32, #tpu.memory_space<vmem>>, vector<1x256xf32>
    %69 = arith.maximumf %68, %63 : vector<1x256xf32>
    %c0_37 = arith.constant 0 : index
    %c0_38 = arith.constant 0 : index
    %70 = vector.load %arg13[%c0_37, %c0_38] : memref<1x256xf32, #tpu.memory_space<vmem>>, vector<1x256xf32>
    tpu.vector_store %arg13[%c0_37, %c0_38], %69 {strides = array<i32>} : memref<1x256xf32, #tpu.memory_space<vmem>>, vector<1x256xf32>,
    %c2_i32 = arith.constant 2 : i32
    %71 = arith.cmpi eq, %arg1, %c2_i32 : i32
    %72 = arith.extui %71 : i1 to i32
    %c0_i32_39 = arith.constant 0 : i32
    %73 = arith.cmpi ne, %72, %c0_i32_39 : i32
    scf.if %73 {
      %c0_40 = arith.constant 0 : index
      %c0_41 = arith.constant 0 : index
      %74 = vector.load %arg12[%c0_40, %c0_41] : memref<1x256xf32, #tpu.memory_space<vmem>>, vector<1x256xf32>
      %75 = vector.shape_cast %74 : vector<1x256xf32> to vector<1x1x256xf32>
      %cst_42 = arith.constant dense<0.000000e+00> : vector<1xf32>
      %76 = vector.multi_reduction <add>, %75, %cst_42 [1, 2] : vector<1x1x256xf32> to vector<1xf32>
      %77 = vector.shape_cast %76 : vector<1xf32> to vector<1x1x1xf32>
      %78 = vector.extract %77[0, 0, 0] : f32 from vector<1x1x1xf32>
      %cst_43 = arith.constant 3.000000e+00 : f32
      %79 = arith.mulf %cst_43, %78 : f32
      %cst_44 = arith.constant 5.990000e+02 : f32
      %80 = arith.minimumf %79, %cst_44 : f32
      %c0_45 = arith.constant 0 : index
      %c0_46 = arith.constant 0 : index
      %c0_47 = arith.constant 0 : index
      %81 = vector.load %arg9[%c0_45, %c0_46, %c0_47] : memref<3x1x256xf32, #tpu.memory_space<vmem>>, vector<3x1x256xf32>
      %c0_48 = arith.constant 0 : index
      %c0_49 = arith.constant 0 : index
      %82 = vector.load %arg13[%c0_48, %c0_49] : memref<1x256xf32, #tpu.memory_space<vmem>>, vector<1x256xf32>
      %83 = vector.shape_cast %82 : vector<1x256xf32> to vector<1x1x256xf32>
      %cst_50 = arith.constant dense<0xFF800000> : vector<1xf32>
      %84 = vector.multi_reduction <maximumf>, %83, %cst_50 [1, 2] : vector<1x1x256xf32> to vector<1xf32>
      %85 = vector.shape_cast %84 : vector<1xf32> to vector<1x1x1xf32>
      %86 = vector.extract %85[0, 0, 0] : f32 from vector<1x1x1xf32>
      %cst_51 = arith.constant 0.000000e+00 : f32
      %c0_i32_52 = arith.constant 0 : i32
      %c16_i32 = arith.constant 16 : i32
      %87 = arith.addi %c0_i32_52, %c16_i32 : i32
      %c1_i32 = arith.constant 1 : i32
      %88:2 = scf.for %arg14 = %c0_i32_52 to %87 step %c1_i32 iter_args(%arg15 = %cst_51, %arg16 = %86) -> (f32, f32)  : i32 {
        %118 = arith.addf %arg15, %arg16 : f32
        %cst_71 = arith.constant 5.000000e-01 : f32
        %119 = arith.mulf %cst_71, %118 : f32
        %120 = vector.broadcast %119 : f32 to vector<3x1x256xf32>
        %121 = arith.cmpf ogt, %81, %120 : vector<3x1x256xf32>
        %122 = arith.extui %121 : vector<3x1x256xi1> to vector<3x1x256xi32>
        %123 = arith.sitofp %122 : vector<3x1x256xi32> to vector<3x1x256xf32>
        %124 = vector.shape_cast %123 : vector<3x1x256xf32> to vector<1x3x1x256xf32>
        %cst_72 = arith.constant dense<0.000000e+00> : vector<1xf32>
        %125 = vector.multi_reduction <add>, %124, %cst_72 [1, 2, 3] : vector<1x3x1x256xf32> to vector<1xf32>
        %126 = vector.shape_cast %125 : vector<1xf32> to vector<1x1x1x1xf32>
        %127 = vector.extract %126[0, 0, 0, 0] : f32 from vector<1x1x1x1xf32>
        %128 = arith.cmpf ole, %127, %80 : f32
        %129 = arith.select %128, %arg15, %119 : f32
        %130 = arith.select %128, %119, %arg16 : f32
        scf.yield %129, %130 : f32, f32
      }
      %89 = vector.broadcast %88#1 : f32 to vector<3x1x256xf32>
      %90 = arith.cmpf ogt, %81, %89 : vector<3x1x256xf32>
      %cst_53 = arith.constant 0.000000e+00 : f32
      %91 = vector.broadcast %cst_53 : f32 to vector<3x1x256xf32>
      %92 = arith.select %90, %81, %91 : vector<3x1x256xi1>, vector<3x1x256xf32>
      %93 = vector.shape_cast %92 : vector<3x1x256xf32> to vector<1x3x1x256xf32>
      %cst_54 = arith.constant dense<0.000000e+00> : vector<1xf32>
      %94 = vector.multi_reduction <add>, %93, %cst_54 [1, 2, 3] : vector<1x3x1x256xf32> to vector<1xf32>
      %95 = vector.shape_cast %94 : vector<1xf32> to vector<1x1x1x1xf32>
      %96 = vector.extract %95[0, 0, 0, 0] : f32 from vector<1x1x1x1xf32>
      %c0_55 = arith.constant 0 : index
      %c0_56 = arith.constant 0 : index
      %97 = vector.load %arg11[%c0_55, %c0_56] : memref<1x256xf32, #tpu.memory_space<vmem>>, vector<1x256xf32>
      %98 = vector.shape_cast %97 : vector<1x256xf32> to vector<1x1x256xf32>
      %cst_57 = arith.constant dense<0.000000e+00> : vector<1xf32>
      %99 = vector.multi_reduction <add>, %98, %cst_57 [1, 2] : vector<1x1x256xf32> to vector<1xf32>
      %100 = vector.shape_cast %99 : vector<1xf32> to vector<1x1x1xf32>
      %101 = vector.extract %100[0, 0, 0] : f32 from vector<1x1x1xf32>
      %102 = arith.addf %101, %96 : f32
      %c0_58 = arith.constant 0 : index
      %c0_59 = arith.constant 0 : index
      %103 = vector.load %arg10[%c0_58, %c0_59] : memref<1x256xf32, #tpu.memory_space<vmem>>, vector<1x256xf32>
      %104 = vector.shape_cast %103 : vector<1x256xf32> to vector<1x1x256xf32>
      %cst_60 = arith.constant dense<0.000000e+00> : vector<1xf32>
      %105 = vector.multi_reduction <add>, %104, %cst_60 [1, 2] : vector<1x1x256xf32> to vector<1xf32>
      %106 = vector.shape_cast %105 : vector<1xf32> to vector<1x1x1xf32>
      %107 = vector.extract %106[0, 0, 0] : f32 from vector<1x1x1xf32>
      %cst_61 = arith.constant 1.000000e+00 : f32
      %108 = vector.broadcast %cst_61 : f32 to vector<1x1x128xf32>
      %109 = vector.broadcast %107 : f32 to vector<1x1x128xf32>
      %110 = arith.mulf %109, %108 : vector<1x1x128xf32>
      %c0_62 = arith.constant 0 : index
      %c0_63 = arith.constant 0 : index
      %c0_64 = arith.constant 0 : index
      %111 = vector.load %arg6[%c0_62, %c0_63, %c0_64] : memref<1x1x128xf32, #tpu.memory_space<vmem>>, vector<1x1x128xf32>
      tpu.vector_store %arg6[%c0_62, %c0_63, %c0_64], %110 {strides = array<i32>} : memref<1x1x128xf32, #tpu.memory_space<vmem>>, vector<1x1x128xf32>,
      %112 = vector.broadcast %102 : f32 to vector<1x1x128xf32>
      %113 = arith.mulf %112, %108 : vector<1x1x128xf32>
      %c0_65 = arith.constant 0 : index
      %c0_66 = arith.constant 0 : index
      %c0_67 = arith.constant 0 : index
      %114 = vector.load %arg7[%c0_65, %c0_66, %c0_67] : memref<1x1x128xf32, #tpu.memory_space<vmem>>, vector<1x1x128xf32>
      tpu.vector_store %arg7[%c0_65, %c0_66, %c0_67], %113 {strides = array<i32>} : memref<1x1x128xf32, #tpu.memory_space<vmem>>, vector<1x1x128xf32>,
      %115 = vector.broadcast %78 : f32 to vector<1x1x128xf32>
      %116 = arith.mulf %115, %108 : vector<1x1x128xf32>
      %c0_68 = arith.constant 0 : index
      %c0_69 = arith.constant 0 : index
      %c0_70 = arith.constant 0 : index
      %117 = vector.load %arg8[%c0_68, %c0_69, %c0_70] : memref<1x1x128xf32, #tpu.memory_space<vmem>>, vector<1x1x128xf32>
      tpu.vector_store %arg8[%c0_68, %c0_69, %c0_70], %116 {strides = array<i32>} : memref<1x1x128xf32, #tpu.memory_space<vmem>>, vector<1x1x128xf32>,
    } else {
    }
    return
  }
  func.func @transform_0(%arg0: i32, %arg1: i32) -> (i32, i32, i32) {
    %c0_i32 = arith.constant 0 : i32
    %c0_i32_0 = arith.constant 0 : i32
    return %arg0, %c0_i32, %arg1 : i32, i32, i32
  }
  func.func @transform_1(%arg0: i32, %arg1: i32) -> (i32, i32, i32) {
    %c0_i32 = arith.constant 0 : i32
    %c0_i32_0 = arith.constant 0 : i32
    return %arg0, %c0_i32, %arg1 : i32, i32, i32
  }
  func.func @transform_2(%arg0: i32, %arg1: i32) -> (i32, i32, i32) {
    %c0_i32 = arith.constant 0 : i32
    %c0_i32_0 = arith.constant 0 : i32
    return %arg0, %c0_i32, %arg1 : i32, i32, i32
  }
  func.func @transform_3(%arg0: i32, %arg1: i32) -> (i32, i32, i32) {
    %c0_i32 = arith.constant 0 : i32
    %c0_i32_0 = arith.constant 0 : i32
    return %arg0, %c0_i32, %arg1 : i32, i32, i32
  }
  func.func @transform_4(%arg0: i32, %arg1: i32) -> (i32, i32, i32) {
    %c0_i32 = arith.constant 0 : i32
    %c0_i32_0 = arith.constant 0 : i32
    %c0_i32_1 = arith.constant 0 : i32
    return %arg0, %c0_i32, %c0_i32_0 : i32, i32, i32
  }
  func.func @transform_5(%arg0: i32, %arg1: i32) -> (i32, i32, i32) {
    %c0_i32 = arith.constant 0 : i32
    %c0_i32_0 = arith.constant 0 : i32
    %c0_i32_1 = arith.constant 0 : i32
    return %arg0, %c0_i32, %c0_i32_0 : i32, i32, i32
  }
  func.func @transform_6(%arg0: i32, %arg1: i32) -> (i32, i32, i32) {
    %c0_i32 = arith.constant 0 : i32
    %c0_i32_0 = arith.constant 0 : i32
    %c0_i32_1 = arith.constant 0 : i32
    return %arg0, %c0_i32, %c0_i32_0 : i32, i32, i32
  }
}

</mosaic_0001>

<llo_original>
// kernel: tpu_custom_call.1
$region0: #{tpu_custom_call.1}
  #allocation0 [shape = 'u32[]', space=smem, size = 0x4, offset = 0x4, fixed_abs, tag = 'smem constant byte address 0x4 - core index']
  #allocation1 [shape = 'u32[144,128]{1,0:T(1,128)}', space=vmem, size = 0x12000, scoped, tag = 'internal scratch']
  #allocation2 [shape = 'f32[3,1,256]{2,1,0:T(1,128)}', space=vmem, size = 0xc00, scoped, tag = 'scratch operand']
  #allocation3 [shape = 'f32[1,256]{1,0:T(1,128)}', space=vmem, size = 0x400, scoped, tag = 'scratch operand']
  #allocation4 [shape = 'f32[1,256]{1,0:T(1,128)}', space=vmem, size = 0x400, scoped, tag = 'scratch operand']
  #allocation5 [shape = 'f32[1,256]{1,0:T(1,128)}', space=vmem, size = 0x400, scoped, tag = 'scratch operand']
  #allocation6 [shape = 'f32[1,256]{1,0:T(1,128)}', space=vmem, size = 0x400, scoped, tag = 'scratch operand']
  %s0 = inlined_call_operand.hbm [shape: f32[2,4,768], index: 0, kind: input, shape index: {}]
  %s1 = inlined_call_operand.hbm [shape: f32[2,8,768], index: 1, kind: input, shape index: {}]
  %s2 = inlined_call_operand.hbm [shape: f32[2,4,768], index: 2, kind: input, shape index: {}]
  %s3 = inlined_call_operand.hbm [shape: s32[2,1,768], index: 3, kind: input, shape index: {}]
  %s4 = inlined_call_operand.hbm [shape: f32[2,1,128], index: 4, kind: output, shape index: {0}]
  %s5 = inlined_call_operand.hbm [shape: f32[2,1,128], index: 5, kind: output, shape index: {1}]
  %s6 = inlined_call_operand.hbm [shape: f32[2,1,128], index: 6, kind: output, shape index: {2}]
  %7 = xla_tuple %s4, %s5, %s6
  %s8 = sld [smem:[#allocation0]]
  $region96: #{tpu_custom_call.1} parent=0
    _
  %s10 = ssub.s32 1, %s8
  %s11 = scalar_select 0, %s10, %s8
  $region1: #{tpu_custom_call.1} parent=0
    #allocation7 [shape = 'u8[8192]{0}', space=vmem, size = 0x2000, scoped, tag = 'input window, operand 0']
    #allocation8 [shape = 's32[2]{0}', space=sflag, size = 0x8, scoped, tag = 'scoped memory for tpu_custom_call.1']
    #allocation9 [shape = 's32[2]{0}', space=sflag, size = 0x8, scoped, tag = 'scoped memory for tpu_custom_call.1']
    #allocation10 [shape = 'u8[16384]{0}', space=vmem, size = 0x4000, scoped, tag = 'input window, operand 1']
    #allocation11 [shape = 's32[2]{0}', space=sflag, size = 0x8, scoped, tag = 'scoped memory for tpu_custom_call.1']
    #allocation12 [shape = 'u8[8192]{0}', space=vmem, size = 0x2000, scoped, tag = 'input window, operand 2']
    #allocation13 [shape = 'u8[2048]{0}', space=vmem, size = 0x800, scoped, tag = 'input window, operand 3']
    #allocation14 [shape = 's32[2]{0}', space=sflag, size = 0x8, scoped, tag = 'scoped memory for tpu_custom_call.1']
    #allocation15 [shape = 'u8[1024]{0}', space=vmem, size = 0x400, scoped, tag = 'output window, operand 0']
    #allocation16 [shape = 'u8[1024]{0}', space=vmem, size = 0x400, scoped, tag = 'output window, operand 1']
    #allocation17 [shape = 's32[2]{0}', space=sflag, size = 0x8, scoped, tag = 'scoped memory for tpu_custom_call.1']
    #allocation18 [shape = 'u8[1024]{0}', space=vmem, size = 0x400, scoped, tag = 'output window, operand 2']
    %12 = vsyncpa [#allocation8], 0
    %s13 = scalar_lea.sflag [#allocation8], 1
    %14 = vsyncpa %s13, 0
    %15 = vsyncpa [#allocation11], 0
    %s16 = scalar_lea.sflag [#allocation11], 1
    %17 = vsyncpa %s16, 0
    %18 = vsyncpa [#allocation14], 0
    %s19 = scalar_lea.sflag [#allocation14], 1
    %20 = vsyncpa %s19, 0
    %21 = vsyncpa [#allocation9], 0
    %s22 = scalar_lea.sflag [#allocation9], 1
    %23 = vsyncpa %s22, 0
    %24 = vsyncpa [#allocation17], 0
    %s25 = scalar_lea.sflag [#allocation17], 1
    %26 = vsyncpa %s25, 0
    loop: start=0, step=1, limit=8
    $region2: #{tpu_custom_call.1} parent=1 // loop_pre_header
      _
    $region3: #{tpu_custom_call.1} parent=1 // loop_header
      %s28 = sphi 0, %s32
      %p29 = scmp.ge.s32.totalorder %s28, 8
      %s35 = sphi 0, %s47
      %s36 = sphi 0, %s43
      %s37 = sphi 0, %s35
      %s38 = sphi 0, %s36
      %s39 = sphi 0, %s37
      %s40 = sphi 0, %s38
      %s52 = sphi 0, %s54
      %s55 = sphi 0, %s52
      %s56 = sphi 0, %s55
      %s72 = sphi 0, %s56
      %s80 = sphi 0, %s82
      %s83 = sphi 0, %s80
      %s84 = sphi 0, %s83
      %s100 = sphi 0, %s84
      %s108 = sphi 0, %s110
      %s111 = sphi 0, %s108
      %s112 = sphi 0, %s111
      %s128 = sphi 0, %s112
      %s136 = sphi 0, %s138
      %s139 = sphi 0, %s136
      %s140 = sphi 0, %s139
      %s156 = sphi 0, %s140
      %s162 = sphi 0, %s164
      %s165 = sphi 0, %s162
      %s166 = sphi 0, %s165
      %s182 = sphi 0, %s166
      %s188 = sphi 0, %s190
      %s191 = sphi 0, %s188
      %s192 = sphi 0, %s191
      %s208 = sphi 0, %s192
      %s214 = sphi 0, %s216
      %s217 = sphi 0, %s214
      %s218 = sphi 0, %s217
      %s234 = sphi 0, %s218
    $region4: #{tpu_custom_call.1} parent=1 // loop_header_branch
      %31 = sbr.rel (%p29) target = $region8
    $region5: #{tpu_custom_call.1} parent=1 // loop_body
      %s33 = ssub.s32 %s28, 1
      %s34 = ssub.s32 %s28, 2
      %s41 = sadd.s32 1, %s36
      %p42 = scmp.ge.s32.totalorder %s41, 3
      %s43 = scalar_select %p42, 0, %s41
      %s44 = sadd.s32 1, %s35
      %s45 = scalar_select %p42, %s44, %s35
      %p46 = scmp.ge.s32.totalorder %s45, 2
      %s47 = scalar_select %p46, 0, %s45
      %s48 = ssub.s32 %s35, %s47
      %s49 = ssub.s32 %s36, %s43
      %s50 = sor.u32 %s48, %s49
      %p51 = scmp.eq.s32.totalorder %s50, 0
      %s53 = sadd.s32 %s52, 1
      %s54 = scalar_select %p51, %s52, %s53
      %p57 = pneg %p51
      %p58 = scmp.eq.s32.totalorder %s28, 5
      %p59 = por %p57, %p58
      %p60 = scmp.ne.s32.totalorder %s52, %s55
      %p61 = scmp.eq.s32.totalorder %s28, 0
      %p62 = por %p60, %p61
      %p63 = scmp.ne.s32.totalorder %s52, %s55
      %p64 = scmp.eq.s32.totalorder %s33, 5
      %p65 = por %p63, %p64
      %p66 = scmp.ne.s32.totalorder %s55, %s56
      %p67 = scmp.eq.s32.totalorder %s33, 0
      %p68 = por %p66, %p67
      %p69 = scmp.ne.s32.totalorder %s55, %s56
      %p70 = scmp.eq.s32.totalorder %s34, 5
      %p71 = por %p69, %p70
      %p73 = scmp.ne.s32.totalorder %s56, %s72
      %p74 = scmp.eq.s32.totalorder %s34, 0
      %p75 = por %p73, %p74
      %s76 = ssub.s32 %s35, %s47
      %s77 = ssub.s32 %s36, %s43
      %s78 = sor.u32 %s76, %s77
      %p79 = scmp.eq.s32.totalorder %s78, 0
      %s81 = sadd.s32 %s80, 1
      %s82 = scalar_select %p79, %s80, %s81
      %p85 = pneg %p79
      %p86 = scmp.eq.s32.totalorder %s28, 5
      %p87 = por %p85, %p86
      %p88 = scmp.ne.s32.totalorder %s80, %s83
      %p89 = scmp.eq.s32.totalorder %s28, 0
      %p90 = por %p88, %p89
      %p91 = scmp.ne.s32.totalorder %s80, %s83
      %p92 = scmp.eq.s32.totalorder %s33, 5
      %p93 = por %p91, %p92
      %p94 = scmp.ne.s32.totalorder %s83, %s84
      %p95 = scmp.eq.s32.totalorder %s33, 0
      %p96 = por %p94, %p95
      %p97 = scmp.ne.s32.totalorder %s83, %s84
      %p98 = scmp.eq.s32.totalorder %s34, 5
      %p99 = por %p97, %p98
      %p101 = scmp.ne.s32.totalorder %s84, %s100
      %p102 = scmp.eq.s32.totalorder %s34, 0
      %p103 = por %p101, %p102
      %s104 = ssub.s32 %s35, %s47
      %s105 = ssub.s32 %s36, %s43
      %s106 = sor.u32 %s104, %s105
      %p107 = scmp.eq.s32.totalorder %s106, 0
      %s109 = sadd.s32 %s108, 1
      %s110 = scalar_select %p107, %s108, %s109
      %p113 = pneg %p107
      %p114 = scmp.eq.s32.totalorder %s28, 5
      %p115 = por %p113, %p114
      %p116 = scmp.ne.s32.totalorder %s108, %s111
      %p117 = scmp.eq.s32.totalorder %s28, 0
      %p118 = por %p116, %p117
      %p119 = scmp.ne.s32.totalorder %s108, %s111
      %p120 = scmp.eq.s32.totalorder %s33, 5
      %p121 = por %p119, %p120
      %p122 = scmp.ne.s32.totalorder %s111, %s112
      %p123 = scmp.eq.s32.totalorder %s33, 0
      %p124 = por %p122, %p123
      %p125 = scmp.ne.s32.totalorder %s111, %s112
      %p126 = scmp.eq.s32.totalorder %s34, 5
      %p127 = por %p125, %p126
      %p129 = scmp.ne.s32.totalorder %s112, %s128
      %p130 = scmp.eq.s32.totalorder %s34, 0
      %p131 = por %p129, %p130
      %s132 = ssub.s32 %s35, %s47
      %s133 = ssub.s32 %s36, %s43
      %s134 = sor.u32 %s132, %s133
      %p135 = scmp.eq.s32.totalorder %s134, 0
      %s137 = sadd.s32 %s136, 1
      %s138 = scalar_select %p135, %s136, %s137
      %p141 = pneg %p135
      %p142 = scmp.eq.s32.totalorder %s28, 5
      %p143 = por %p141, %p142
      %p144 = scmp.ne.s32.totalorder %s136, %s139
      %p145 = scmp.eq.s32.totalorder %s28, 0
      %p146 = por %p144, %p145
      %p147 = scmp.ne.s32.totalorder %s136, %s139
      %p148 = scmp.eq.s32.totalorder %s33, 5
      %p149 = por %p147, %p148
      %p150 = scmp.ne.s32.totalorder %s139, %s140
      %p151 = scmp.eq.s32.totalorder %s33, 0
      %p152 = por %p150, %p151
      %p153 = scmp.ne.s32.totalorder %s139, %s140
      %p154 = scmp.eq.s32.totalorder %s34, 5
      %p155 = por %p153, %p154
      %p157 = scmp.ne.s32.totalorder %s140, %s156
      %p158 = scmp.eq.s32.totalorder %s34, 0
      %p159 = por %p157, %p158
      %s160 = ssub.s32 %s35, %s47
      %p161 = scmp.eq.s32.totalorder %s160, 0
      %s163 = sadd.s32 %s162, 1
      %s164 = scalar_select %p161, %s162, %s163
      %p167 = pneg %p161
      %p168 = scmp.eq.s32.totalorder %s28, 5
      %p169 = por %p167, %p168
      %p170 = scmp.ne.s32.totalorder %s162, %s165
      %p171 = scmp.eq.s32.totalorder %s28, 0
      %p172 = por %p170, %p171
      %p173 = scmp.ne.s32.totalorder %s162, %s165
      %p174 = scmp.eq.s32.totalorder %s33, 5
      %p175 = por %p173, %p174
      %p176 = scmp.ne.s32.totalorder %s165, %s166
      %p177 = scmp.eq.s32.totalorder %s33, 0
      %p178 = por %p176, %p177
      %p179 = scmp.ne.s32.totalorder %s165, %s166
      %p180 = scmp.eq.s32.totalorder %s34, 5
      %p181 = por %p179, %p180
      %p183 = scmp.ne.s32.totalorder %s166, %s182
      %p184 = scmp.eq.s32.totalorder %s34, 0
      %p185 = por %p183, %p184
      %s186 = ssub.s32 %s35, %s47
      %p187 = scmp.eq.s32.totalorder %s186, 0
      %s189 = sadd.s32 %s188, 1
      %s190 = scalar_select %p187, %s188, %s189
      %p193 = pneg %p187
      %p194 = scmp.eq.s32.totalorder %s28, 5
      %p195 = por %p193, %p194
      %p196 = scmp.ne.s32.totalorder %s188, %s191
      %p197 = scmp.eq.s32.totalorder %s28, 0
      %p198 = por %p196, %p197
      %p199 = scmp.ne.s32.totalorder %s188, %s191
      %p200 = scmp.eq.s32.totalorder %s33, 5
      %p201 = por %p199, %p200
      %p202 = scmp.ne.s32.totalorder %s191, %s192
      %p203 = scmp.eq.s32.totalorder %s33, 0
      %p204 = por %p202, %p203
      %p205 = scmp.ne.s32.totalorder %s191, %s192
      %p206 = scmp.eq.s32.totalorder %s34, 5
      %p207 = por %p205, %p206
      %p209 = scmp.ne.s32.totalorder %s192, %s208
      %p210 = scmp.eq.s32.totalorder %s34, 0
      %p211 = por %p209, %p210
      %s212 = ssub.s32 %s35, %s47
      %p213 = scmp.eq.s32.totalorder %s212, 0
      %s215 = sadd.s32 %s214, 1
      %s216 = scalar_select %p213, %s214, %s215
      %p219 = pneg %p213
      %p220 = scmp.eq.s32.totalorder %s28, 5
      %p221 = por %p219, %p220
      %p222 = scmp.ne.s32.totalorder %s214, %s217
      %p223 = scmp.eq.s32.totalorder %s28, 0
      %p224 = por %p222, %p223
      %p225 = scmp.ne.s32.totalorder %s214, %s217
      %p226 = scmp.eq.s32.totalorder %s33, 5
      %p227 = por %p225, %p226
      %p228 = scmp.ne.s32.totalorder %s217, %s218
      %p229 = scmp.eq.s32.totalorder %s33, 0
      %p230 = por %p228, %p229
      %p231 = scmp.ne.s32.totalorder %s217, %s218
      %p232 = scmp.eq.s32.totalorder %s34, 5
      %p233 = por %p231, %p232
      %p235 = scmp.ne.s32.totalorder %s218, %s234
      %p236 = scmp.eq.s32.totalorder %s34, 0
      %p237 = por %p235, %p236
      %p238 = scmp.le.s32.totalorder 1, %s28
      %p239 = scmp.lt.s32.totalorder %s28, 7
      %p240 = pnand %p238, %p239
      %p241 = pneg %p240
      // Predicated region
      $region9: #{tpu_custom_call.1} parent=5 // pred_check
        _
      $region10: #{tpu_custom_call.1} parent=5 // pred_check_branch
        %243 = sbr.rel (%p240) target = $region12
      $region11: #{tpu_custom_call.1} parent=5 // pred_region
        %s244 = ssub.s32 %s28, 1
      $region12: #{tpu_custom_call.1} parent=5 // pred_fallthru
        _
      %p245 = scmp.lt.s32.totalorder %s28, 6
      // Predicated region
      $region13: #{tpu_custom_call.1} parent=5 // pred_check
        %p246 = pneg %p245
      $region14: #{tpu_custom_call.1} parent=5 // pred_check_branch
        %248 = sbr.rel (%p246) target = $region16
      $region15: #{tpu_custom_call.1} parent=5 // pred_region
        // Predicated region
        $region17: #{tpu_custom_call.1} parent=15 // pred_check
          %p249 = pneg %p62
        $region18: #{tpu_custom_call.1} parent=15 // pred_check_branch
          %251 = sbr.rel (%p249) target = $region20
        $region19: #{tpu_custom_call.1} parent=15 // pred_region
          %s252 = sand.u32 %s52, 1
          %s253 = scalar_lea.sflag [#allocation8], %s252
          %s254 = sand.u32 %s52, 1
          %s255 = smul.addr %s254, 8
          %s256 = scalar_lea.vmem [#allocation7], %s255
          %s257 = smul.u32 2, %s36
          %s259 = ssub.s32 128, 128
          %260 = vsyncadd %s253, %s259
          %s261 = smul.addr %s35, 6
          %s262 = sadd.s32 %s257, %s261
          %s263 = smul.addr %s262, 64
          %s264 = scalar_lea.hbm %s0, %s263
          %s266 = sshll.u32 %s256, 4
          %s267 = int_to_ptr.vmem [resolvable:$true] %s266
          %269 = dma.hbm_to_vmem [thread:$0]  %s264, 128, %s267, %s253
        $region20: #{tpu_custom_call.1} parent=15 // pred_fallthru
          _
        // Predicated region
        $region21: #{tpu_custom_call.1} parent=15 // pred_check
          %p270 = pneg %p90
        $region22: #{tpu_custom_call.1} parent=15 // pred_check_branch
          %272 = sbr.rel (%p270) target = $region24
        $region23: #{tpu_custom_call.1} parent=15 // pred_region
          %s273 = sand.u32 %s28, 1
          %s274 = scalar_lea.sflag [#allocation11], %s273
          %s275 = sand.u32 %s80, 1
          %s276 = smul.addr %s275, 16
          %s277 = scalar_lea.vmem [#allocation10], %s276
          %s278 = smul.u32 2, %s36
          %s280 = ssub.s32 256, 256
          %281 = vsyncadd %s274, %s280
          %s282 = smul.addr %s35, 6
          %s283 = sadd.s32 %s278, %s282
          %s284 = smul.addr %s283, 128
          %s285 = scalar_lea.hbm %s1, %s284
          %s287 = sshll.u32 %s277, 4
          %s288 = int_to_ptr.vmem [resolvable:$true] %s287
          %290 = dma.hbm_to_vmem [thread:$0]  %s285, 256, %s288, %s274
        $region24: #{tpu_custom_call.1} parent=15 // pred_fallthru
          _
        // Predicated region
        $region25: #{tpu_custom_call.1} parent=15 // pred_check
          %p291 = pneg %p118
        $region26: #{tpu_custom_call.1} parent=15 // pred_check_branch
          %293 = sbr.rel (%p291) target = $region28
        $region27: #{tpu_custom_call.1} parent=15 // pred_region
          %s294 = sand.u32 %s28, 1
          %s295 = scalar_lea.sflag [#allocation11], %s294
          %s296 = sand.u32 %s108, 1
          %s297 = smul.addr %s296, 8
          %s298 = scalar_lea.vmem [#allocation12], %s297
          %s299 = smul.u32 2, %s36
          %s301 = ssub.s32 128, 128
          %302 = vsyncadd %s295, %s301
          %s303 = smul.addr %s35, 6
          %s304 = sadd.s32 %s299, %s303
          %s305 = smul.addr %s304, 64
          %s306 = scalar_lea.hbm %s2, %s305
          %s308 = sshll.u32 %s298, 4
          %s309 = int_to_ptr.vmem [resolvable:$true] %s308
          %311 = dma.hbm_to_vmem [thread:$0]  %s306, 128, %s309, %s295
        $region28: #{tpu_custom_call.1} parent=15 // pred_fallthru
          _
        // Predicated region
        $region29: #{tpu_custom_call.1} parent=15 // pred_check
          %p312 = pneg %p146
        $region30: #{tpu_custom_call.1} parent=15 // pred_check_branch
          %314 = sbr.rel (%p312) target = $region32
        $region31: #{tpu_custom_call.1} parent=15 // pred_region
          %s315 = sand.u32 %s136, 1
          %s316 = scalar_lea.sflag [#allocation14], %s315
          %s317 = sand.u32 %s136, 1
          %s318 = smul.addr %s317, 2
          %s319 = scalar_lea.vmem [#allocation13], %s318
          %s320 = smul.u32 2, %s36
          %s322 = ssub.s32 32, 32
          %323 = vsyncadd %s316, %s322
          %s324 = smul.addr %s35, 6
          %s325 = sadd.s32 %s320, %s324
          %s326 = smul.addr %s325, 16
          %s327 = scalar_lea.hbm %s3, %s326
          %s329 = sshll.u32 %s319, 4
          %s330 = int_to_ptr.vmem [resolvable:$true] %s329
          %332 = dma.hbm_to_vmem [thread:$0]  %s327, 32, %s330, %s316
        $region32: #{tpu_custom_call.1} parent=15 // pred_fallthru
          _
      $region16: #{tpu_custom_call.1} parent=5 // pred_fallthru
        _
      %p333 = scmp.le.s32.totalorder 1, %s28
      %p334 = scmp.lt.s32.totalorder %s28, 7
      %p335 = pnand %p333, %p334
      %p336 = pneg %p335
      // Predicated region
      $region33: #{tpu_custom_call.1} parent=5 // pred_check
        _
      $region34: #{tpu_custom_call.1} parent=5 // pred_check_branch
        %338 = sbr.rel (%p335) target = $region36
      $region35: #{tpu_custom_call.1} parent=5 // pred_region
        %s339 = ssub.s32 %s28, 1
        %s340 = sand.u32 %s55, 1
        %s341 = scalar_lea.sflag [#allocation8], %s340
        %s342 = sand.u32 %s55, 1
        %s343 = smul.addr %s342, 8
        %s344 = scalar_lea.vmem [#allocation7], %s343
        // Predicated region
        $region37: #{tpu_custom_call.1} parent=35 // pred_check
          %p345 = pneg %p68
        $region38: #{tpu_custom_call.1} parent=35 // pred_check_branch
          %347 = sbr.rel (%p345) target = $region40
        $region39: #{tpu_custom_call.1} parent=35 // pred_region
          %348 = dma.done %s341, 128
        $region40: #{tpu_custom_call.1} parent=35 // pred_fallthru
          _
        %s349 = sand.u32 %s33, 1
        %s350 = scalar_lea.sflag [#allocation11], %s349
        %s351 = sand.u32 %s83, 1
        %s352 = smul.addr %s351, 16
        %s353 = scalar_lea.vmem [#allocation10], %s352
        // Predicated region
        $region41: #{tpu_custom_call.1} parent=35 // pred_check
          %p354 = pneg %p96
        $region42: #{tpu_custom_call.1} parent=35 // pred_check_branch
          %356 = sbr.rel (%p354) target = $region44
        $region43: #{tpu_custom_call.1} parent=35 // pred_region
          %357 = dma.done %s350, 256
        $region44: #{tpu_custom_call.1} parent=35 // pred_fallthru
          _
        %s358 = sand.u32 %s33, 1
        %s359 = scalar_lea.sflag [#allocation11], %s358
        %s360 = sand.u32 %s111, 1
        %s361 = smul.addr %s360, 8
        %s362 = scalar_lea.vmem [#allocation12], %s361
        // Predicated region
        $region45: #{tpu_custom_call.1} parent=35 // pred_check
          %p363 = pneg %p124
        $region46: #{tpu_custom_call.1} parent=35 // pred_check_branch
          %365 = sbr.rel (%p363) target = $region48
        $region47: #{tpu_custom_call.1} parent=35 // pred_region
          %366 = dma.done %s359, 128
        $region48: #{tpu_custom_call.1} parent=35 // pred_fallthru
          _
        %s367 = sand.u32 %s139, 1
        %s368 = scalar_lea.sflag [#allocation14], %s367
        %s369 = sand.u32 %s139, 1
        %s370 = smul.addr %s369, 2
        %s371 = scalar_lea.vmem [#allocation13], %s370
        // Predicated region
        $region49: #{tpu_custom_call.1} parent=35 // pred_check
          %p372 = pneg %p152
        $region50: #{tpu_custom_call.1} parent=35 // pred_check_branch
          %374 = sbr.rel (%p372) target = $region52
        $region51: #{tpu_custom_call.1} parent=35 // pred_region
          %375 = dma.done %s368, 32
        $region52: #{tpu_custom_call.1} parent=35 // pred_fallthru
          _
        %s376 = sand.u32 %s55, 1
        %s377 = scalar_lea.sflag [#allocation8], %s376
        %s378 = sand.u32 %s55, 1
        %s379 = smul.addr %s378, 8
        %s380 = scalar_lea.vmem [#allocation7], %s379
        %p381 = pneg %p68
        %p382 = pneg %p65
        %s383 = sand.u32 %s33, 1
        %s384 = scalar_lea.sflag [#allocation11], %s383
        %s385 = sand.u32 %s83, 1
        %s386 = smul.addr %s385, 16
        %s387 = scalar_lea.vmem [#allocation10], %s386
        %p388 = pneg %p96
        %p389 = pneg %p93
        %s390 = sand.u32 %s33, 1
        %s391 = scalar_lea.sflag [#allocation11], %s390
        %s392 = sand.u32 %s111, 1
        %s393 = smul.addr %s392, 8
        %s394 = scalar_lea.vmem [#allocation12], %s393
        %p395 = pneg %p124
        %p396 = pneg %p121
        %s397 = sand.u32 %s139, 1
        %s398 = scalar_lea.sflag [#allocation14], %s397
        %s399 = sand.u32 %s139, 1
        %s400 = smul.addr %s399, 2
        %s401 = scalar_lea.vmem [#allocation13], %s400
        %p402 = pneg %p152
        %p403 = pneg %p149
        %p404 = pneg %p178
        %p405 = pneg %p175
        %s406 = sand.u32 %s165, 1
        %s407 = scalar_lea.sflag [#allocation9], %s406
        %s408 = sand.u32 %s165, 1
        %s409 = scalar_lea.vmem [#allocation15], %s408
        %p410 = pneg %p204
        %p411 = pneg %p201
        %s412 = sand.u32 %s33, 1
        %s413 = scalar_lea.sflag [#allocation17], %s412
        %s414 = sand.u32 %s191, 1
        %s415 = scalar_lea.vmem [#allocation16], %s414
        %p416 = pneg %p230
        %p417 = pneg %p227
        %s418 = sand.u32 %s33, 1
        %s419 = scalar_lea.sflag [#allocation17], %s418
        %s420 = sand.u32 %s217, 1
        %s421 = scalar_lea.vmem [#allocation18], %s420
        %s422 = smul.u32 2, %s38
        %s423 = smul.u32 2, %s38
        %s424 = smul.u32 2, %s38
        %s425 = smul.u32 2, %s38
        %p426 = scmp.eq.s32.totalorder %s38, 0
        // Predicated region
        $region53: #{tpu_custom_call.1} parent=35 // pred_check
          %p427 = pneg %p426
        $region54: #{tpu_custom_call.1} parent=35 // pred_check_branch
          %429 = sbr.rel (%p427) target = $region56
        $region55: #{tpu_custom_call.1} parent=35 // pred_region
          %v430 = vlaneseq
          %vm431 = vcmp.ge.s32.totalorder %v430, 0
          %vm432 = vcmp.lt.s32.totalorder %v430, 256
          %vm433 = vmand %vm431, %vm432
          %434 = vst.msk [vmem:[#allocation3] sm:$0x3] %vm433, 0.0
          %435 = vst.msk [vmem:[#allocation4] sm:$0x3] %vm433, 0.0
          %436 = vst.msk [vmem:[#allocation5] sm:$0x3] %vm433, 0.0
          %437 = vst.msk [vmem:[#allocation6] sm:$0x3] %vm433, 0.0
        $region56: #{tpu_custom_call.1} parent=35 // pred_fallthru
          _
        %v438 = vld [vmem:[%s353] sm:$0xff]
        %v439 = vld [vmem:[%s353 + $0x8] sm:$0xff]
        %v440 = vld [vmem:[%s371] sm:$0x3]
        %v441 = vlaneseq
        %v442 = vand.u32 %v441, 127
        %v443 = vadd.s32 %v442, 128
        %s444 = smul.u32 %s38, 256
        %v445 = vstv %s444
        %v446 = vadd.s32 %v445, %v442
        %v447 = vadd.s32 %v445, %v443
        %vm448 = vcmp.lt.s32.totalorder %v446, 600
        %vm449 = vcmp.lt.s32.totalorder %v447, 600
        %vm450 = vcmp.gt.s32.totalorder %v440, 0
        %v451 = vsel %vm448, 1, 0
        %v452 = vsel %vm449, 1, 0
        %v453 = vcombine.low %v451, %v452
        %v455 = vunpack.c.l.s4 1966171168
        %v456 = vunpack.c.0.s8 %v455
        %v457 = vlaneseq
        %v458 = vshrl.u32 %v457, 7
        %v459 = vsub.s32 %v456, %v458
        %v460 = vrot.slane %v453, %v459
        %v462 = vunpack.c.l.s4 1966171168
        %v463 = vunpack.c.0.s8 %v462
        %v464 = vlaneseq
        %v465 = vshrl.u32 %v464, 7
        %v466 = vsub.s32 %v463, %v465
        %v467 = vrot.slane %v460, %v466
        %vm468 = vcmp.ne.s32.totalorder %v467, 0
        %vm469 = vmand %vm450, %vm468
        %v470 = vsel %vm469, 1, 0
        %v471 = vcvt.s32.f32 %v470
        %v472 = vld [vmem:[%s344] sm:$0xff]
        %v473 = vld [vmem:[%s362] sm:$0xff]
        %v474 = vsub.f32 %v472, %v473
        %v475 = vand.u32 2147483647, %v474
        %vm476 = vcmp.lt.f32.partialorder %v475, 1.0
        %v477 = vmul.f32 %v474, 0.5
        %v478 = vmul.f32 %v477, %v474
        %v479 = vsub.f32 %v475, 0.5
        %v480 = vsel %vm476, %v478, %v479
        %v481 = vld [vmem:[#allocation3] sm:$0x3]
        %v483 = vcombine.high %v480, %v480
        %vm485 = vcmask 1043456
        %v486 = vsel %vm485, %v480, 0.0
        %v487 = vrot.slane %v486, 4
        %v488 = vadd.f32 %v486, %v487
        %v489 = vrot.slane %v488, 2
        %v490 = vadd.f32 %v488, %v489
        %v491 = vrot.slane %v490, 1
        %v492 = vadd.f32 %v490, %v491
        %v493 = vsel %vm485, %v483, 0.0
        %v494 = vrot.slane %v493, 4
        %v495 = vadd.f32 %v493, %v494
        %v496 = vrot.slane %v495, 2
        %v497 = vadd.f32 %v495, %v496
        %v498 = vrot.slane %v497, 1
        %v499 = vadd.f32 %v497, %v498
        %v501 = vlaneseq
        %v502 = vshrl.u32 %v501, 7
        %v503 = vsub.s32 0, %v502
        %v504 = vrot.slane %v471, %v503
        %v505 = vlaneseq
        %v506 = vshrl.u32 %v505, 7
        %v507 = vsub.s32 1, %v506
        %v508 = vrot.slane %v471, %v507
        %v511 = vmul.f32 %v492, %v504
        %v512 = vmul.f32 %v499, %v508
        %v515 = vcombine.low %v511, %v512
        %v517 = vunpack.c.l.s4 1966171168
        %v518 = vunpack.c.0.s8 %v517
        %v519 = vlaneseq
        %v520 = vshrl.u32 %v519, 7
        %v521 = vsub.s32 %v518, %v520
        %v522 = vrot.slane %v515, %v521
        %v524 = vunpack.c.l.s4 1966171168
        %v525 = vunpack.c.0.s8 %v524
        %v526 = vlaneseq
        %v527 = vshrl.u32 %v526, 7
        %v528 = vsub.s32 %v525, %v527
        %v529 = vrot.slane %v522, %v528
        %v531 = vadd.f32 %v481, %v529
        %v532 = vlaneseq
        %vm533 = vcmp.ge.s32.totalorder %v532, 0
        %vm534 = vcmp.lt.s32.totalorder %v532, 256
        %vm535 = vmand %vm533, %vm534
        %536 = vst.msk [vmem:[#allocation3] sm:$0x3] %vm535, %v531
        %v537 = vrot.slane %v438, 4
        %v538 = vmax.f32 %v438, %v537
        %v539 = vrot.slane %v538, 2
        %v540 = vmax.f32 %v538, %v539
        %v541 = vrot.slane %v540, 1
        %v542 = vmax.f32 %v540, %v541
        %v543 = vrot.slane %v439, 4
        %v544 = vmax.f32 %v439, %v543
        %v545 = vrot.slane %v544, 2
        %v546 = vmax.f32 %v544, %v545
        %v547 = vrot.slane %v546, 1
        %v548 = vmax.f32 %v546, %v547
        %v549 = vsub.f32 %v438, %v542
        %v550 = vsub.f32 %v439, %v548
        %v551 = vmul.f32 %v549, 1.442695
        %v552 = vpow.pop %v551
        %v553 = vmul.f32 %v550, 1.442695
        %v554 = vpow.pop %v553
        %v555 = vrot.slane %v552, 4
        %v556 = vadd.f32 %v552, %v555
        %v557 = vrot.slane %v556, 2
        %v558 = vadd.f32 %v556, %v557
        %v559 = vrot.slane %v558, 1
        %v560 = vadd.f32 %v558, %v559
        %v561 = vrot.slane %v554, 4
        %v562 = vadd.f32 %v554, %v561
        %v563 = vrot.slane %v562, 2
        %v564 = vadd.f32 %v562, %v563
        %v565 = vrot.slane %v564, 1
        %v566 = vadd.f32 %v564, %v565
        %v567 = vlog2.pop %v560
        %v568 = vmul.f32 %v567, 0.6931472
        %v569 = vlog2.pop %v566
        %v570 = vmul.f32 %v569, 0.6931472
        %v571 = vadd.f32 %v568, %v542
        %v572 = vadd.f32 %v570, %v548
        %v573 = vlaneseq
        %v574 = vshrl.u32 %v573, 7
        %v575 = vlaneseq
        %v576 = vshrl.u32 %v575, 7
        %v577 = vsub.s32 0, %v576
        %v578 = vrot.slane %v440, %v577
        %v579 = vlaneseq
        %v580 = vshrl.u32 %v579, 7
        %v581 = vsub.s32 1, %v580
        %v582 = vrot.slane %v440, %v581
        %vm583 = vcmp.eq.s32.totalorder %v574, %v578
        %vm584 = vcmp.eq.s32.totalorder %v574, %v582
        %v585 = vsel %vm583, 1, 0
        %v586 = vsel %vm584, 1, 0
        %v587 = vcvt.s32.f32 %v585
        %v588 = vcvt.s32.f32 %v586
        %v589 = vmul.f32 %v438, %v587
        %v590 = vmul.f32 %v439, %v588
        %v591 = vrot.slane %v589, 4
        %v592 = vadd.f32 %v589, %v591
        %v593 = vrot.slane %v592, 2
        %v594 = vadd.f32 %v592, %v593
        %v595 = vrot.slane %v594, 1
        %v596 = vadd.f32 %v594, %v595
        %v597 = vrot.slane %v590, 4
        %v598 = vadd.f32 %v590, %v597
        %v599 = vrot.slane %v598, 2
        %v600 = vadd.f32 %v598, %v599
        %v601 = vrot.slane %v600, 1
        %v602 = vadd.f32 %v600, %v601
        %v603 = vsub.f32 %v571, %v596
        %v604 = vsub.f32 %v572, %v602
        %v605 = vld [vmem:[#allocation4] sm:$0x3]
        %v606 = vmul.f32 %v603, %v504
        %v607 = vmul.f32 %v604, %v508
        %v610 = vcombine.low %v606, %v607
        %v612 = vunpack.c.l.s4 1966171168
        %v613 = vunpack.c.0.s8 %v612
        %v614 = vlaneseq
        %v615 = vshrl.u32 %v614, 7
        %v616 = vsub.s32 %v613, %v615
        %v617 = vrot.slane %v610, %v616
        %v619 = vunpack.c.l.s4 1966171168
        %v620 = vunpack.c.0.s8 %v619
        %v621 = vlaneseq
        %v622 = vshrl.u32 %v621, 7
        %v623 = vsub.s32 %v620, %v622
        %v624 = vrot.slane %v617, %v623
        %v626 = vadd.f32 %v605, %v624
        %627 = vst.msk [vmem:[#allocation4] sm:$0x3] %vm535, %v626
        %v628 = vld [vmem:[#allocation5] sm:$0x3]
        %v629 = vadd.f32 %v628, %v471
        %630 = vst.msk [vmem:[#allocation5] sm:$0x3] %vm535, %v629
        %vm631 = vmxor %vm448, 1
        %vm632 = vmxor %vm449, 1
        %v633 = vsel %vm631, 1, 0
        %v634 = vsel %vm632, 1, 0
        %v635 = vcombine.low %v633, %v634
        %v637 = vunpack.c.l.s4 1966171168
        %v638 = vunpack.c.0.s8 %v637
        %v639 = vlaneseq
        %v640 = vshrl.u32 %v639, 7
        %v641 = vsub.s32 %v638, %v640
        %v642 = vrot.slane %v635, %v641
        %v644 = vunpack.c.l.s4 1966171168
        %v645 = vunpack.c.0.s8 %v644
        %v646 = vlaneseq
        %v647 = vshrl.u32 %v646, 7
        %v648 = vsub.s32 %v645, %v647
        %v649 = vrot.slane %v642, %v648
        %vm650 = vcmp.ne.s32.totalorder %v649, 0
        %vm651 = vmor %vm469, %vm650
        %v654 = vcombine.low %v603, %v604
        %v656 = vunpack.c.l.s4 1966171168
        %v657 = vunpack.c.0.s8 %v656
        %v658 = vlaneseq
        %v659 = vshrl.u32 %v658, 7
        %v660 = vsub.s32 %v657, %v659
        %v661 = vrot.slane %v654, %v660
        %v663 = vunpack.c.l.s4 1966171168
        %v664 = vunpack.c.0.s8 %v663
        %v665 = vlaneseq
        %v666 = vshrl.u32 %v665, 7
        %v667 = vsub.s32 %v664, %v666
        %v668 = vrot.slane %v661, %v667
        %v670 = vsel %vm651, 0.0, %v668
        %s671 = smul.u32 %s38, 2
        %s672 = scalar_lea.vmem [#allocation2], %s671
        %673 = vst.msk [vmem:[%s672] sm:$0x3] %vm535, %v670
        %v674 = vld [vmem:[#allocation6] sm:$0x3]
        %v675 = vmax.f32 %v674, %v670
        %676 = vst.msk [vmem:[#allocation6] sm:$0x3] %vm535, %v675
        %p677 = scmp.eq.s32.totalorder %s38, 2
        // Predicated region
        $region57: #{tpu_custom_call.1} parent=35 // pred_check
          %p678 = pneg %p677
        $region58: #{tpu_custom_call.1} parent=35 // pred_check_branch
          %680 = sbr.rel (%p678) target = $region60
        $region59: #{tpu_custom_call.1} parent=35 // pred_region
          %v681 = vld [vmem:[#allocation5] sm:$0x3]
          %v683 = vlaneseq
          %v684 = vshrl.u32 %v683, 7
          %v685 = vsub.s32 0, %v684
          %v686 = vrot.slane %v681, %v685
          %v687 = vlaneseq
          %v688 = vshrl.u32 %v687, 7
          %v689 = vsub.s32 1, %v688
          %v690 = vrot.slane %v681, %v689
          %vm693 = vcmask 1040384
          %v694 = vsel %vm693, %v686, 0.0
          %v695 = vsel %vm693, %v690, 0.0
          %v696 = vadd.f32 %v694, %v695
          %697 = vadd.xlane.f32.xlu0 %v696
          %v698 = vpop.xlane.xlu0 %697
          %v699 = vrot.slane %v698, 4
          %v700 = vadd.f32 %v698, %v699
          %v701 = vrot.slane %v700, 2
          %v702 = vadd.f32 %v700, %v701
          %v703 = vrot.slane %v702, 1
          %v704 = vadd.f32 %v702, %v703
          %s705 = vtos %v704
          %s706 = smul.f32 %s705, 3.0
          %s707 = smin.f32 %s706, 599.0
          %v708 = vld [vmem:[#allocation2] sm:$0x3]
          %v709 = vld [vmem:[#allocation2 + $0x2] sm:$0x3]
          %v710 = vld [vmem:[#allocation2 + $0x4] sm:$0x3]
          %v711 = vld [vmem:[#allocation6] sm:$0x3]
          %v713 = vlaneseq
          %v714 = vshrl.u32 %v713, 7
          %v715 = vsub.s32 0, %v714
          %v716 = vrot.slane %v711, %v715
          %v717 = vlaneseq
          %v718 = vshrl.u32 %v717, 7
          %v719 = vsub.s32 1, %v718
          %v720 = vrot.slane %v711, %v719
          %v723 = vsel %vm693, %v716, -inf
          %v724 = vsel %vm693, %v720, -inf
          %v725 = vmax.f32 %v723, %v724
          %726 = vmax.xlane.f32.xlu0 %v725
          %v727 = vpop.xlane.xlu0 %726
          %v728 = vrot.slane %v727, 4
          %v729 = vmax.f32 %v727, %v728
          %v730 = vrot.slane %v729, 2
          %v731 = vmax.f32 %v729, %v730
          %v732 = vrot.slane %v731, 1
          %v733 = vmax.f32 %v731, %v732
          %s734 = vtos %v733
          loop: start=0, step=1, limit=16
          $region61: #{tpu_custom_call.1} parent=59 // loop_pre_header
            _
          $region62: #{tpu_custom_call.1} parent=59 // loop_header
            %s736 = sphi 0, %s740
            %p737 = scmp.ge.s32.totalorder %s736, 16
            %s741 = sphi 0.0, %s809
            %s742 = sphi %s734, %s810
          $region63: #{tpu_custom_call.1} parent=59 // loop_header_branch
            %739 = sbr.rel (%p737) target = $region67
          $region64: #{tpu_custom_call.1} parent=59 // loop_body
            %s743 = sadd.f32 %s741, %s742
            %s744 = smul.f32 %s743, 0.5
            %v745 = vstv %s744
            %vm746 = vcmp.gt.f32.partialorder %v708, %v745
            %vm747 = vcmp.gt.f32.partialorder %v709, %v745
            %vm748 = vcmp.gt.f32.partialorder %v710, %v745
            %v749 = vsel %vm746, 1, 0
            %v750 = vsel %vm747, 1, 0
            %v751 = vsel %vm748, 1, 0
            %v752 = vcvt.s32.f32 %v749
            %v753 = vcvt.s32.f32 %v750
            %v754 = vcvt.s32.f32 %v751
            %v758 = vlaneseq
            %v759 = vshrl.u32 %v758, 7
            %v760 = vsub.s32 0, %v759
            %v761 = vrot.slane %v752, %v760
            %v762 = vlaneseq
            %v763 = vshrl.u32 %v762, 7
            %v764 = vsub.s32 1, %v763
            %v765 = vrot.slane %v752, %v764
            %v766 = vlaneseq
            %v767 = vshrl.u32 %v766, 7
            %v768 = vsub.s32 0, %v767
            %v769 = vrot.slane %v753, %v768
            %v770 = vlaneseq
            %v771 = vshrl.u32 %v770, 7
            %v772 = vsub.s32 1, %v771
            %v773 = vrot.slane %v753, %v772
            %v774 = vlaneseq
            %v775 = vshrl.u32 %v774, 7
            %v776 = vsub.s32 0, %v775
            %v777 = vrot.slane %v754, %v776
            %v778 = vlaneseq
            %v779 = vshrl.u32 %v778, 7
            %v780 = vsub.s32 1, %v779
            %v781 = vrot.slane %v754, %v780
            %v788 = vsel %vm693, %v761, 0.0
            %v789 = vsel %vm693, %v765, 0.0
            %v790 = vadd.f32 %v788, %v789
            %v791 = vsel %vm693, %v769, 0.0
            %v792 = vadd.f32 %v790, %v791
            %v793 = vsel %vm693, %v773, 0.0
            %v794 = vadd.f32 %v792, %v793
            %v795 = vsel %vm693, %v777, 0.0
            %v796 = vadd.f32 %v794, %v795
            %v797 = vsel %vm693, %v781, 0.0
            %v798 = vadd.f32 %v796, %v797
            %799 = vadd.xlane.f32.xlu0 %v798
            %v800 = vpop.xlane.xlu0 %799
            %v801 = vrot.slane %v800, 4
            %v802 = vadd.f32 %v800, %v801
            %v803 = vrot.slane %v802, 2
            %v804 = vadd.f32 %v802, %v803
            %v805 = vrot.slane %v804, 1
            %v806 = vadd.f32 %v804, %v805
            %s807 = vtos %v806
            %p808 = scmp.le.f32.partialorder %s807, %s707
            %s809 = scalar_select %p808, %s741, %s744
            %s810 = scalar_select %p808, %s744, %s742
          $region65: #{tpu_custom_call.1} parent=59 // loop_footer
            %s740 = sadd.s32 1, %s736
          $region66: #{tpu_custom_call.1} parent=59 // loop_footer_branch
            %735 = sbr.rel target = $region62
          $region67: #{tpu_custom_call.1} parent=59 // loop_exit
            _
          %v811 = vstv %s742
          %vm812 = vcmp.gt.f32.partialorder %v708, %v811
          %vm813 = vcmp.gt.f32.partialorder %v709, %v811
          %vm814 = vcmp.gt.f32.partialorder %v710, %v811
          %v815 = vsel %vm812, %v708, 0.0
          %v816 = vsel %vm813, %v709, 0.0
          %v817 = vsel %vm814, %v710, 0.0
          %v821 = vlaneseq
          %v822 = vshrl.u32 %v821, 7
          %v823 = vsub.s32 0, %v822
          %v824 = vrot.slane %v815, %v823
          %v825 = vlaneseq
          %v826 = vshrl.u32 %v825, 7
          %v827 = vsub.s32 1, %v826
          %v828 = vrot.slane %v815, %v827
          %v829 = vlaneseq
          %v830 = vshrl.u32 %v829, 7
          %v831 = vsub.s32 0, %v830
          %v832 = vrot.slane %v816, %v831
          %v833 = vlaneseq
          %v834 = vshrl.u32 %v833, 7
          %v835 = vsub.s32 1, %v834
          %v836 = vrot.slane %v816, %v835
          %v837 = vlaneseq
          %v838 = vshrl.u32 %v837, 7
          %v839 = vsub.s32 0, %v838
          %v840 = vrot.slane %v817, %v839
          %v841 = vlaneseq
          %v842 = vshrl.u32 %v841, 7
          %v843 = vsub.s32 1, %v842
          %v844 = vrot.slane %v817, %v843
          %v851 = vsel %vm693, %v824, 0.0
          %v852 = vsel %vm693, %v828, 0.0
          %v853 = vadd.f32 %v851, %v852
          %v854 = vsel %vm693, %v832, 0.0
          %v855 = vadd.f32 %v853, %v854
          %v856 = vsel %vm693, %v836, 0.0
          %v857 = vadd.f32 %v855, %v856
          %v858 = vsel %vm693, %v840, 0.0
          %v859 = vadd.f32 %v857, %v858
          %v860 = vsel %vm693, %v844, 0.0
          %v861 = vadd.f32 %v859, %v860
          %862 = vadd.xlane.f32.xlu0 %v861
          %v863 = vpop.xlane.xlu0 %862
          %v864 = vrot.slane %v863, 4
          %v865 = vadd.f32 %v863, %v864
          %v866 = vrot.slane %v865, 2
          %v867 = vadd.f32 %v865, %v866
          %v868 = vrot.slane %v867, 1
          %v869 = vadd.f32 %v867, %v868
          %s870 = vtos %v869
          %v871 = vld [vmem:[#allocation4] sm:$0x3]
          %v873 = vlaneseq
          %v874 = vshrl.u32 %v873, 7
          %v875 = vsub.s32 0, %v874
          %v876 = vrot.slane %v871, %v875
          %v877 = vlaneseq
          %v878 = vshrl.u32 %v877, 7
          %v879 = vsub.s32 1, %v878
          %v880 = vrot.slane %v871, %v879
          %v883 = vsel %vm693, %v876, 0.0
          %v884 = vsel %vm693, %v880, 0.0
          %v885 = vadd.f32 %v883, %v884
          %886 = vadd.xlane.f32.xlu0 %v885
          %v887 = vpop.xlane.xlu0 %886
          %v888 = vrot.slane %v887, 4
          %v889 = vadd.f32 %v887, %v888
          %v890 = vrot.slane %v889, 2
          %v891 = vadd.f32 %v889, %v890
          %v892 = vrot.slane %v891, 1
          %v893 = vadd.f32 %v891, %v892
          %s894 = vtos %v893
          %s895 = sadd.f32 %s894, %s870
          %v896 = vld [vmem:[#allocation3] sm:$0x3]
          %v898 = vlaneseq
          %v899 = vshrl.u32 %v898, 7
          %v900 = vsub.s32 0, %v899
          %v901 = vrot.slane %v896, %v900
          %v902 = vlaneseq
          %v903 = vshrl.u32 %v902, 7
          %v904 = vsub.s32 1, %v903
          %v905 = vrot.slane %v896, %v904
          %v908 = vsel %vm693, %v901, 0.0
          %v909 = vsel %vm693, %v905, 0.0
          %v910 = vadd.f32 %v908, %v909
          %911 = vadd.xlane.f32.xlu0 %v910
          %v912 = vpop.xlane.xlu0 %911
          %v913 = vrot.slane %v912, 4
          %v914 = vadd.f32 %v912, %v913
          %v915 = vrot.slane %v914, 2
          %v916 = vadd.f32 %v914, %v915
          %v917 = vrot.slane %v916, 1
          %v918 = vadd.f32 %v916, %v917
          %s919 = vtos %v918
          %v920 = vstv %s919
          %921 = vst [vmem:[%s409] sm:$0x1] %v920
          %v922 = vstv %s895
          %923 = vst [vmem:[%s415] sm:$0x1] %v922
          %v924 = vstv %s705
          %925 = vst [vmem:[%s421] sm:$0x1] %v924
        $region60: #{tpu_custom_call.1} parent=35 // pred_fallthru
          _
        %s926 = sand.u32 %s165, 1
        %s927 = scalar_lea.sflag [#allocation9], %s926
        %s928 = sand.u32 %s165, 1
        %s929 = scalar_lea.vmem [#allocation15], %s928
        %s930 = sand.u32 %s33, 1
        %s931 = scalar_lea.sflag [#allocation17], %s930
        %s932 = sand.u32 %s191, 1
        %s933 = scalar_lea.vmem [#allocation16], %s932
        %s934 = sand.u32 %s33, 1
        %s935 = scalar_lea.sflag [#allocation17], %s934
        %s936 = sand.u32 %s217, 1
        %s937 = scalar_lea.vmem [#allocation18], %s936
        // Predicated region
        $region68: #{tpu_custom_call.1} parent=35 // pred_check
          %p938 = pneg %p175
        $region69: #{tpu_custom_call.1} parent=35 // pred_check_branch
          %940 = sbr.rel (%p938) target = $region71
        $region70: #{tpu_custom_call.1} parent=35 // pred_region
          %s942 = ssub.s32 16, 16
          %943 = vsyncadd %s927, %s942
          %s944 = smul.addr %s37, 16
          %s945 = scalar_lea.hbm %s4, %s944
          %s947 = sshll.u32 %s929, 4
          %s948 = int_to_ptr.vmem [resolvable:$true] %s947
          %950 = dma.vmem_to_hbm [thread:$0]  %s948, 16, %s945, %s927
        $region71: #{tpu_custom_call.1} parent=35 // pred_fallthru
          _
        // Predicated region
        $region72: #{tpu_custom_call.1} parent=35 // pred_check
          %p951 = pneg %p201
        $region73: #{tpu_custom_call.1} parent=35 // pred_check_branch
          %953 = sbr.rel (%p951) target = $region75
        $region74: #{tpu_custom_call.1} parent=35 // pred_region
          %s955 = ssub.s32 16, 16
          %956 = vsyncadd %s931, %s955
          %s957 = smul.addr %s37, 16
          %s958 = scalar_lea.hbm %s5, %s957
          %s960 = sshll.u32 %s933, 4
          %s961 = int_to_ptr.vmem [resolvable:$true] %s960
          %963 = dma.vmem_to_hbm [thread:$0]  %s961, 16, %s958, %s931
        $region75: #{tpu_custom_call.1} parent=35 // pred_fallthru
          _
        // Predicated region
        $region76: #{tpu_custom_call.1} parent=35 // pred_check
          %p964 = pneg %p227
        $region77: #{tpu_custom_call.1} parent=35 // pred_check_branch
          %966 = sbr.rel (%p964) target = $region79
        $region78: #{tpu_custom_call.1} parent=35 // pred_region
          %s968 = ssub.s32 16, 16
          %969 = vsyncadd %s935, %s968
          %s970 = smul.addr %s37, 16
          %s971 = scalar_lea.hbm %s6, %s970
          %s973 = sshll.u32 %s937, 4
          %s974 = int_to_ptr.vmem [resolvable:$true] %s973
          %976 = dma.vmem_to_hbm [thread:$0]  %s974, 16, %s971, %s935
        $region79: #{tpu_custom_call.1} parent=35 // pred_fallthru
          _
      $region36: #{tpu_custom_call.1} parent=5 // pred_fallthru
        _
      %p977 = scmp.le.s32.totalorder 2, %s28
      // Predicated region
      $region80: #{tpu_custom_call.1} parent=5 // pred_check
        %p978 = pneg %p977
      $region81: #{tpu_custom_call.1} parent=5 // pred_check_branch
        %980 = sbr.rel (%p978) target = $region83
      $region82: #{tpu_custom_call.1} parent=5 // pred_region
        %s981 = ssub.s32 %s28, 2
        // Predicated region
        $region84: #{tpu_custom_call.1} parent=82 // pred_check
          %p982 = pneg %p181
        $region85: #{tpu_custom_call.1} parent=82 // pred_check_branch
          %984 = sbr.rel (%p982) target = $region87
        $region86: #{tpu_custom_call.1} parent=82 // pred_region
          %s985 = sand.u32 %s166, 1
          %s986 = scalar_lea.sflag [#allocation9], %s985
          %s987 = sand.u32 %s166, 1
          %s988 = scalar_lea.vmem [#allocation15], %s987
          %989 = dma.done %s986, 16
        $region87: #{tpu_custom_call.1} parent=82 // pred_fallthru
          _
        // Predicated region
        $region88: #{tpu_custom_call.1} parent=82 // pred_check
          %p990 = pneg %p207
        $region89: #{tpu_custom_call.1} parent=82 // pred_check_branch
          %992 = sbr.rel (%p990) target = $region91
        $region90: #{tpu_custom_call.1} parent=82 // pred_region
          %s993 = sand.u32 %s34, 1
          %s994 = scalar_lea.sflag [#allocation17], %s993
          %s995 = sand.u32 %s192, 1
          %s996 = scalar_lea.vmem [#allocation16], %s995
          %997 = dma.done %s994, 16
        $region91: #{tpu_custom_call.1} parent=82 // pred_fallthru
          _
        // Predicated region
        $region92: #{tpu_custom_call.1} parent=82 // pred_check
          %p998 = pneg %p233
        $region93: #{tpu_custom_call.1} parent=82 // pred_check_branch
          %1000 = sbr.rel (%p998) target = $region95
        $region94: #{tpu_custom_call.1} parent=82 // pred_region
          %s1001 = sand.u32 %s34, 1
          %s1002 = scalar_lea.sflag [#allocation17], %s1001
          %s1003 = sand.u32 %s218, 1
          %s1004 = scalar_lea.vmem [#allocation18], %s1003
          %1005 = dma.done %s1002, 16
        $region95: #{tpu_custom_call.1} parent=82 // pred_fallthru
          _
      $region83: #{tpu_custom_call.1} parent=5 // pred_fallthru
        _
    $region6: #{tpu_custom_call.1} parent=1 // loop_footer
      %s32 = sadd.s32 1, %s28
    $region7: #{tpu_custom_call.1} parent=1 // loop_footer_branch
      %27 = sbr.rel target = $region3
    $region8: #{tpu_custom_call.1} parent=1 // loop_exit
      _
    %1006 = vsyncpa [#allocation8], 1
    %s1007 = scalar_lea.sflag [#allocation8], 1
    %1008 = vsyncpa %s1007, 1
    %1009 = vsyncpa [#allocation11], 1
    %s1010 = scalar_lea.sflag [#allocation11], 1
    %1011 = vsyncpa %s1010, 1
    %1012 = vsyncpa [#allocation14], 1
    %s1013 = scalar_lea.sflag [#allocation14], 1
    %1014 = vsyncpa %s1013, 1
    %1015 = vsyncpa [#allocation9], 1
    %s1016 = scalar_lea.sflag [#allocation9], 1
    %1017 = vsyncpa %s1016, 1
    %1018 = vsyncpa [#allocation17], 1
    %s1019 = scalar_lea.sflag [#allocation17], 1
    %1020 = vsyncpa %s1019, 1

</llo_original>
